<compile_context>
chip_gen: v7x
topology: tpu7x:2x2x1
jax: 0.10.0
libtpu: 0.0.40
codegen_flags: <defaults>
</compile_context>

<pallas_src>
import jax
import jax.numpy as jnp
from jax.experimental import pallas as pl
from jax.experimental.pallas import tpu as pltpu


# ---------------------------------------------------------------------------
# Tiling / hardware helpers
# ---------------------------------------------------------------------------
def _cdiv(a, b):
    return (a + b - 1) // b


def _round_up(x, m):
    return _cdiv(x, m) * m


def _vmem_info():
    """Return (physical VMEM bytes, per-kernel working-set budget bytes)."""
    try:
        cap = int(pltpu.get_tpu_info().vmem_capacity_bytes)
    except Exception:
        cap = 64 << 20  # conservative fallback: v7x per-TensorCore VMEM
    # ~45% of physical for the double-buffered working set, capped at 56 MiB:
    #   v7x (64 MiB)  -> ~28 MiB     v5e / v6e (128 MiB) -> 56 MiB
    budget = min(int(cap * 0.45), 56 << 20)
    return cap, budget


def _supports_bf16_math():
    """bf16 VALU/EUP exist on v6e and newer; keep f32 math on v5e and older."""
    try:
        kind = jax.devices()[0].device_kind.lower()
    except Exception:
        return False
    return not any(tag in kind for tag in ("v2", "v3", "v4", "v5"))


def _select_tiling(hw, n_batch, n_in, c1, c2, in_isz, out_isz, cm_isz, budget):
    """Pick (spatial tile, #tiles, padded HW, est. per-step VMEM bytes)."""
    hw128 = _round_up(hw, 128)
    # Bytes of VMEM needed per lane of spatial tile:
    per_lane = (2 * n_in * c1 * in_isz   # double-buffered input blocks
                + 2 * c2 * out_isz       # double-buffered output block
                + 3 * c1 * cm_isz        # z / s intermediates (+ slack)
                + c2 * 4)                # f32 matmul result before final cast
    fixed = 2 * (c2 * c1 * in_isz + c2 * 4)  # resident conv weight + bias
    avail = max(budget - fixed, per_lane * 128)
    max_ts = max((avail // per_lane) // 128 * 128, 128)

    n_tiles = max(_cdiv(hw128, max_ts), 1)
    # Keep both v7x TensorCores busy (harmless elsewhere): guarantee >= 2 steps.
    if n_batch * n_tiles == 1 and hw128 >= 256:
        n_tiles = 2

    ts = _round_up(_cdiv(hw128, n_tiles), 128)
    hw_pad = ts * n_tiles
    est_bytes = fixed + per_lane * ts
    return ts, n_tiles, hw_pad, est_bytes


# ---------------------------------------------------------------------------
# Kernel
# ---------------------------------------------------------------------------
def _make_biconcat_kernel(n_in, compute_dtype, dot_precision):
    """Kernel for a BiConcat with `n_in` (2 or 3) fused inputs."""

    def kernel(wn_ref, *refs):
        x_refs = refs[:n_in]          # each: [C1, TS]  (VMEM tile)
        w_ref = refs[n_in]            # [C2, C1] 1x1-conv weight (resident)
        b_ref = refs[n_in + 1]        # [C2, 1]  conv bias       (resident)
        o_ref = refs[n_in + 2]        # [C2, TS] output tile

        # Weighted fuse; normalized scalar weights come from SMEM (f32).
        z = wn_ref[0].astype(compute_dtype) * x_refs[0][...].astype(compute_dtype)
        for i in range(1, n_in):
            z = z + wn_ref[i].astype(compute_dtype) * x_refs[i][...].astype(compute_dtype)

        # Swish: z*sigmoid(z) == 0.5*z*(1 + tanh(z/2)). tanh runs on the EUP
        # (free slot) and there is no f32 divide on the VALU.
        half = jnp.asarray(0.5, compute_dtype)
        one = jnp.asarray(1.0, compute_dtype)
        s = (half * z) * (one + jnp.tanh(half * z))

        # 1x1 conv == channel matmul on the MXU with f32 accumulation.
        out = jnp.dot(w_ref[...], s,
                      preferred_element_type=jnp.float32,
                      precision=dot_precision)
        out = out + b_ref[...]
        o_ref[...] = out.astype(o_ref.dtype)

    return kernel


# ---------------------------------------------------------------------------
# Wrapper
# ---------------------------------------------------------------------------
def biconcat_forward(xs, w_fuse, conv_w, conv_b, eps=1e-4):
    """Fused BiConcat forward.

    xs:      list of 2 or 3 NCHW arrays, each [N, C1, H, W]
    w_fuse:  fusion parameter, shape (len(xs),)   (module's w1 / w2)
    conv_w:  1x1 conv weight, [C2, C1, 1, 1]
    conv_b:  conv bias, [C2]
    """
    n_in = len(xs)
    assert n_in in (2, 3), "BiConcat supports 2 or 3 inputs"
    N, C1, H, W = xs[0].shape
    C2 = conv_w.shape[0]
    HW = H * W
    dtype = xs[0].dtype

    # Compute dtype: bf16 math only for bf16 inputs on chips with bf16 VALU/EUP.
    use_bf16 = (jnp.dtype(dtype) == jnp.dtype(jnp.bfloat16)) and _supports_bf16_math()
    compute_dtype = jnp.bfloat16 if use_bf16 else jnp.float32
    dot_precision = None if use_bf16 else jax.lax.Precision.HIGHEST

    in_isz = jnp.dtype(dtype).itemsize
    cm_isz = jnp.dtype(compute_dtype).itemsize

    cap, budget = _vmem_info()
    ts, n_tiles, hw_pad, est_bytes = _select_tiling(
        HW, N, n_in, C1, C2, in_isz, in_isz, cm_isz, budget)

    # Normalized fusion weights: tiny scalar compute, handed to the kernel via SMEM.
    wn = (w_fuse / (jnp.sum(w_fuse) + eps)).astype(jnp.float32)

    # NCHW -> [N, C, H*W]: channels on sublanes, spatial on lanes (lane-dense).
    # Pad the lane axis so every tile is an exact multiple of 128 lanes
    # (unmasked stores); padded columns are sliced away at the end.
    xs2 = [x.reshape(N, C1, HW) for x in xs]
    if hw_pad != HW:
        pad = hw_pad - HW
        xs2 = [jnp.pad(x, ((0, 0), (0, 0), (0, pad))) for x in xs2]

    wmat = conv_w.reshape(C2, C1).astype(compute_dtype)
    bvec = conv_b.reshape(C2, 1).astype(jnp.float32)

    x_spec = pl.BlockSpec((None, C1, ts), lambda n, s: (n, 0, s))
    in_specs = (
        [pl.BlockSpec(memory_space=pltpu.MemorySpace.SMEM)]      # wn scalars
        + [x_spec] * n_in                                        # fused inputs
        + [pl.BlockSpec((C2, C1), lambda n, s: (0, 0)),          # conv weight (resident)
           pl.BlockSpec((C2, 1), lambda n, s: (0, 0))]           # conv bias   (resident)
    )
    out_spec = pl.BlockSpec((None, C2, ts), lambda n, s: (n, 0, s))

    elems = N * C1 * hw_pad
    cost = pl.CostEstimate(
        flops=(2 * n_in + 6) * elems + 2 * N * C2 * C1 * hw_pad + N * C2 * hw_pad,
        transcendentals=elems,
        bytes_accessed=(n_in * elems + N * C2 * hw_pad) * in_isz,
    )

    # Explicit VMEM limit: chosen working set + headroom, never above physical.
    vmem_limit = int(min(cap, max(32 << 20, int(1.5 * est_bytes) + (8 << 20))))

    out = pl.pallas_call(
        _make_biconcat_kernel(n_in, compute_dtype, dot_precision),
        out_shape=jax.ShapeDtypeStruct((N, C2, hw_pad), dtype),
        grid=(N, n_tiles),
        in_specs=in_specs,
        out_specs=out_spec,
        compiler_params=pltpu.CompilerParams(
            dimension_semantics=("parallel", "parallel"),
            vmem_limit_bytes=vmem_limit),
        cost_estimate=cost,
    )(wn, *xs2, wmat, bvec)

    if hw_pad != HW:
        out = out[:, :, :HW]
    return out.reshape(N, C2, H, W)


def biconcat_ref(xs, w_fuse, conv_w, conv_b, eps=1e-4):
    """Pure-JAX reference matching the PyTorch forward."""
    wn = w_fuse / (jnp.sum(w_fuse) + eps)
    z = wn[0] * xs[0]
    for i in range(1, len(xs)):
        z = z + wn[i] * xs[i]
    s = z * (1.0 / (1.0 + jnp.exp(-z)))
    wmat = conv_w.reshape(conv_w.shape[0], conv_w.shape[1])
    out = jnp.einsum("oc,nchw->nohw", wmat, s,
                     precision=jax.lax.Precision.HIGHEST)
    return out + conv_b.reshape(1, -1, 1, 1)


if __name__ == "__main__":
    key = jax.random.PRNGKey(0)
    N, C1, C2, H, W = 2, 8, 16, 16, 16
    k = jax.random.split(key, 7)

    x0 = jax.random.normal(k[0], (N, C1, H, W), dtype=jnp.float32)
    x1 = jax.random.normal(k[1], (N, C1, H, W), dtype=jnp.float32)
    x2 = jax.random.normal(k[2], (N, C1, H, W), dtype=jnp.float32)
    conv_w = jax.random.normal(k[3], (C2, C1, 1, 1), dtype=jnp.float32) * 0.1
    conv_b = jax.random.normal(k[4], (C2,), dtype=jnp.float32) * 0.1
    w1 = jnp.ones((2,), dtype=jnp.float32)   # module init: nn.Parameter(torch.ones(2))
    w2 = jnp.ones((3,), dtype=jnp.float32)   # module init: nn.Parameter(torch.ones(3))

    # 2-input branch
    y2 = biconcat_forward([x0, x1], w1, conv_w, conv_b)
    jax.block_until_ready(y2)
    y2_ref = biconcat_ref([x0, x1], w1, conv_w, conv_b)
    assert y2.shape == (N, C2, H, W) and y2.dtype == x0.dtype
    assert jnp.allclose(y2, y2_ref, atol=1e-4, rtol=1e-4), "2-input mismatch vs reference"

    # 3-input branch
    y3 = biconcat_forward([x0, x1, x2], w2, conv_w, conv_b)
    jax.block_until_ready(y3)
    y3_ref = biconcat_ref([x0, x1, x2], w2, conv_w, conv_b)
    assert y3.shape == (N, C2, H, W)
    assert jnp.allclose(y3, y3_ref, atol=1e-4, rtol=1e-4), "3-input mismatch vs reference"

    # Non-lane-aligned spatial size (H*W not a multiple of 128): exercises padding path.
    Hp, Wp = 9, 7
    xa = jax.random.normal(k[5], (N, C1, Hp, Wp), dtype=jnp.float32)
    xb = jax.random.normal(k[6], (N, C1, Hp, Wp), dtype=jnp.float32)
    yp = biconcat_forward([xa, xb], w1, conv_w, conv_b)
    jax.block_until_ready(yp)
    yp_ref = biconcat_ref([xa, xb], w1, conv_w, conv_b)
    assert yp.shape == (N, C2, Hp, Wp)
    assert jnp.allclose(yp, yp_ref, atol=1e-4, rtol=1e-4), "padded-HW mismatch vs reference"

    print("KERNEL_OK")
</pallas_src>

<mosaic_0001>
module attributes {stable_mosaic.version = 11 : i64} {
  func.func @kernel(%arg0: i32, %arg1: i32, %arg2: memref<2xf32, #tpu.memory_space<smem>>, %arg3: memref<1x8x256xf32, #tpu.memory_space<vmem>>, %arg4: memref<1x8x256xf32, #tpu.memory_space<vmem>>, %arg5: memref<16x8xf32, #tpu.memory_space<vmem>>, %arg6: memref<16x1xf32, #tpu.memory_space<vmem>>, %arg7: memref<1x16x256xf32, #tpu.memory_space<vmem>>) attributes {dimension_semantics = [#tpu.dimension_semantics<parallel>, #tpu.dimension_semantics<parallel>], iteration_bounds = array<i64: 2, 1>, scalar_prefetch = 0 : i64, scratch_operands = 0 : i64, tpu.core_type = #tpu.core_type<tc>, window_params = [{transform_indices = @transform_0, window_bounds = array<i64: 2>}, {transform_indices = @transform_1, window_bounds = array<i64: 1, 8, 256>}, {transform_indices = @transform_2, window_bounds = array<i64: 1, 8, 256>}, {pipeline_mode = #tpu.pipeline_mode<synchronous>, transform_indices = @transform_3, window_bounds = array<i64: 16, 8>}, {pipeline_mode = #tpu.pipeline_mode<synchronous>, transform_indices = @transform_4, window_bounds = array<i64: 16, 1>}, {transform_indices = @transform_5, window_bounds = array<i64: 1, 16, 256>}]} {
    %c0 = arith.constant 0 : index
    %0 = memref.load %arg2[%c0] : memref<2xf32, #tpu.memory_space<smem>>
    %c0_0 = arith.constant 0 : index
    %c0_1 = arith.constant 0 : index
    %c0_2 = arith.constant 0 : index
    %1 = vector.load %arg3[%c0_0, %c0_1, %c0_2] : memref<1x8x256xf32, #tpu.memory_space<vmem>>, vector<1x8x256xf32>
    %2 = vector.shape_cast %1 : vector<1x8x256xf32> to vector<8x256xf32>
    %3 = vector.broadcast %0 : f32 to vector<8x256xf32>
    %4 = arith.mulf %3, %2 : vector<8x256xf32>
    %c1 = arith.constant 1 : index
    %5 = memref.load %arg2[%c1] : memref<2xf32, #tpu.memory_space<smem>>
    %c0_3 = arith.constant 0 : index
    %c0_4 = arith.constant 0 : index
    %c0_5 = arith.constant 0 : index
    %6 = vector.load %arg4[%c0_3, %c0_4, %c0_5] : memref<1x8x256xf32, #tpu.memory_space<vmem>>, vector<1x8x256xf32>
    %7 = vector.shape_cast %6 : vector<1x8x256xf32> to vector<8x256xf32>
    %8 = vector.broadcast %5 : f32 to vector<8x256xf32>
    %9 = arith.mulf %8, %7 : vector<8x256xf32>
    %10 = arith.addf %4, %9 : vector<8x256xf32>
    %cst = arith.constant 5.000000e-01 : f32
    %11 = vector.broadcast %cst : f32 to vector<8x256xf32>
    %12 = arith.mulf %11, %10 : vector<8x256xf32>
    %cst_6 = arith.constant 5.000000e-01 : f32
    %13 = vector.broadcast %cst_6 : f32 to vector<8x256xf32>
    %14 = arith.mulf %13, %10 : vector<8x256xf32>
    %15 = math.tanh %14 : vector<8x256xf32>
    %cst_7 = arith.constant 1.000000e+00 : f32
    %16 = vector.broadcast %cst_7 : f32 to vector<8x256xf32>
    %17 = arith.addf %16, %15 : vector<8x256xf32>
    %18 = arith.mulf %12, %17 : vector<8x256xf32>
    %c0_8 = arith.constant 0 : index
    %c0_9 = arith.constant 0 : index
    %19 = vector.load %arg5[%c0_8, %c0_9] : memref<16x8xf32, #tpu.memory_space<vmem>>, vector<16x8xf32>
    %cst_10 = arith.constant dense<0.000000e+00> : vector<16x256xf32>
    %20 = tpu.matmul %19, %18, %cst_10 {dimension_numbers = #tpu.dot_dimension_numbers<[1], [0], [0], [1], [0, 0, 1, 1], [], []>, precision = #tpu.contract_precision<fp32>} : vector<16x8xf32>, vector<8x256xf32>, vector<16x256xf32> -> vector<16x256xf32>
    %c0_11 = arith.constant 0 : index
    %c0_12 = arith.constant 0 : index
    %21 = vector.load %arg6[%c0_11, %c0_12] : memref<16x1xf32, #tpu.memory_space<vmem>>, vector<16x1xf32>
    %22 = vector.broadcast %21 : vector<16x1xf32> to vector<16x256xf32>
    %23 = arith.addf %20, %22 : vector<16x256xf32>
    %c0_13 = arith.constant 0 : index
    %c0_14 = arith.constant 0 : index
    %c0_15 = arith.constant 0 : index
    %24 = vector.load %arg7[%c0_13, %c0_14, %c0_15] : memref<1x16x256xf32, #tpu.memory_space<vmem>>, vector<1x16x256xf32>
    %25 = vector.shape_cast %24 : vector<1x16x256xf32> to vector<16x256xf32>
    %26 = vector.shape_cast %23 : vector<16x256xf32> to vector<1x16x256xf32>
    tpu.vector_store %arg7[%c0_13, %c0_14, %c0_15], %26 {strides = array<i32>} : memref<1x16x256xf32, #tpu.memory_space<vmem>>, vector<1x16x256xf32>,
    return
  }
  func.func @transform_0(%arg0: i32, %arg1: i32) -> i32 {
    %c0_i32 = arith.constant 0 : i32
    %c0_i32_0 = arith.constant 0 : i32
    return %c0_i32 : i32
  }
  func.func @transform_1(%arg0: i32, %arg1: i32) -> (i32, i32, i32) {
    %c0_i32 = arith.constant 0 : i32
    %c0_i32_0 = arith.constant 0 : i32
    return %arg0, %c0_i32, %arg1 : i32, i32, i32
  }
  func.func @transform_2(%arg0: i32, %arg1: i32) -> (i32, i32, i32) {
    %c0_i32 = arith.constant 0 : i32
    %c0_i32_0 = arith.constant 0 : i32
    return %arg0, %c0_i32, %arg1 : i32, i32, i32
  }
  func.func @transform_3(%arg0: i32, %arg1: i32) -> (i32, i32) {
    %c0_i32 = arith.constant 0 : i32
    %c0_i32_0 = arith.constant 0 : i32
    %c0_i32_1 = arith.constant 0 : i32
    return %c0_i32, %c0_i32_0 : i32, i32
  }
  func.func @transform_4(%arg0: i32, %arg1: i32) -> (i32, i32) {
    %c0_i32 = arith.constant 0 : i32
    %c0_i32_0 = arith.constant 0 : i32
    %c0_i32_1 = arith.constant 0 : i32
    return %c0_i32, %c0_i32_0 : i32, i32
  }
  func.func @transform_5(%arg0: i32, %arg1: i32) -> (i32, i32, i32) {
    %c0_i32 = arith.constant 0 : i32
    %c0_i32_0 = arith.constant 0 : i32
    return %arg0, %c0_i32, %arg1 : i32, i32, i32
  }
}

</mosaic_0001>

<llo_original>
// kernel: tpu_custom_call.1
$region0: #{tpu_custom_call.1}
  #allocation0 [shape = 'u32[]', space=smem, size = 0x4, offset = 0x4, fixed_abs, tag = 'smem constant byte address 0x4 - core index']
  #allocation1 [shape = 'u32[144,128]{1,0:T(1,128)}', space=vmem, size = 0x12000, scoped, tag = 'internal scratch']
  %s0 = inlined_call_operand.vmem [shape: f32[2], index: 0, kind: input, shape index: {}]
  %s1 = inlined_call_operand.vmem [shape: f32[2,8,256], index: 1, kind: input, shape index: {}]
  %s2 = inlined_call_operand.hbm [shape: f32[2,8,256], index: 2, kind: input, shape index: {}]
  %s3 = inlined_call_operand.vmem [shape: f32[16,8], index: 3, kind: input, shape index: {}]
  %s4 = inlined_call_operand.vmem [shape: f32[16,1], index: 4, kind: input, shape index: {}]
  %s5 = inlined_call_operand.hbm [shape: f32[2,16,256], index: 5, kind: output, shape index: {}]
  %s6 = sld [smem:[#allocation0]]
  $region61: #{tpu_custom_call.1} parent=0
    _
  %s8 = ssub.s32 1, %s6
  %s9 = scalar_select 0, %s8, %s6
  $region1: #{tpu_custom_call.1} parent=0
    #allocation2 [shape = 'u8[512]{0}', space=smem, size = 0x200, scoped, tag = 'input window, operand 0, single buffered']
    #allocation3 [shape = 's32[2]{0}', space=sflag, size = 0x8, scoped, tag = 'scoped memory for tpu_custom_call.1']
    #allocation4 [shape = 's32[2]{0}', space=sflag, size = 0x8, scoped, tag = 'scoped memory for tpu_custom_call.1']
    #allocation5 [shape = 's32[2]{0}', space=sflag, size = 0x8, scoped, tag = 'scoped memory for tpu_custom_call.1']
    #allocation6 [shape = 'u8[16384]{0}', space=vmem, size = 0x4000, scoped, tag = 'input window, operand 2']
    #allocation7 [shape = 'u8[32768]{0}', space=vmem, size = 0x8000, scoped, tag = 'output window, operand 0']
    %10 = vsyncpa [#allocation5], 0
    %11 = vsyncpa [#allocation3], 0
    %s12 = scalar_lea.sflag [#allocation3], 1
    %13 = vsyncpa %s12, 0
    %14 = vsyncpa [#allocation4], 0
    %s15 = scalar_lea.sflag [#allocation4], 1
    %16 = vsyncpa %s15, 0
    loop: start=0, step=1, limit=4
    $region2: #{tpu_custom_call.1} parent=1 // loop_pre_header
      _
    $region3: #{tpu_custom_call.1} parent=1 // loop_header
      %s18 = sphi 0, %s22
      %p19 = scmp.ge.s32.totalorder %s18, 4
      %s25 = sphi 0, %s37
      %s26 = sphi 0, %s33
      %s27 = sphi 0, %s25
      %s28 = sphi 0, %s26
      %s29 = sphi 0, %s27
      %s30 = sphi 0, %s28
      %s38 = sphi 0, %s38
      %s40 = sphi 0, %s38
      %s41 = sphi 0, %s40
      %s55 = sphi 0, %s41
      %s63 = sphi 0, %s65
      %s66 = sphi 0, %s63
      %s67 = sphi 0, %s66
      %s83 = sphi 0, %s67
      %s91 = sphi 0, %s93
      %s94 = sphi 0, %s91
      %s95 = sphi 0, %s94
      %s111 = sphi 0, %s95
      %s115 = sphi 0, %s115
      %s117 = sphi 0, %s115
      %s118 = sphi 0, %s117
      %s132 = sphi 0, %s118
      %s136 = sphi 0, %s136
      %s138 = sphi 0, %s136
      %s139 = sphi 0, %s138
      %s153 = sphi 0, %s139
      %s161 = sphi 0, %s163
      %s164 = sphi 0, %s161
      %s165 = sphi 0, %s164
      %s181 = sphi 0, %s165
    $region4: #{tpu_custom_call.1} parent=1 // loop_header_branch
      %21 = sbr.rel (%p19) target = $region8
    $region5: #{tpu_custom_call.1} parent=1 // loop_body
      %s23 = ssub.s32 %s18, 1
      %s24 = ssub.s32 %s18, 2
      %s31 = sadd.s32 1, %s26
      %p32 = scmp.ge.s32.totalorder %s31, 1
      %s33 = scalar_select %p32, 0, %s31
      %s34 = sadd.s32 1, %s25
      %s35 = scalar_select %p32, %s34, %s25
      %p36 = scmp.ge.s32.totalorder %s35, 2
      %s37 = scalar_select %p36, 0, %s35
      %s39 = sadd.s32 %s38, 1
      %p42 = scmp.eq.s32.totalorder %s18, 1
      %p43 = scmp.ne.s32.totalorder %s38, %s40
      %p44 = scmp.eq.s32.totalorder %s18, 0
      %p45 = por %p43, %p44
      %p46 = scmp.ne.s32.totalorder %s38, %s40
      %p47 = scmp.eq.s32.totalorder %s23, 1
      %p48 = por %p46, %p47
      %p49 = scmp.ne.s32.totalorder %s40, %s41
      %p50 = scmp.eq.s32.totalorder %s23, 0
      %p51 = por %p49, %p50
      %p52 = scmp.ne.s32.totalorder %s40, %s41
      %p53 = scmp.eq.s32.totalorder %s24, 1
      %p54 = por %p52, %p53
      %p56 = scmp.ne.s32.totalorder %s41, %s55
      %p57 = scmp.eq.s32.totalorder %s24, 0
      %p58 = por %p56, %p57
      %s59 = ssub.s32 %s25, %s37
      %s60 = ssub.s32 %s26, %s33
      %s61 = sor.u32 %s59, %s60
      %p62 = scmp.eq.s32.totalorder %s61, 0
      %s64 = sadd.s32 %s63, 1
      %s65 = scalar_select %p62, %s63, %s64
      %p68 = pneg %p62
      %p69 = scmp.eq.s32.totalorder %s18, 1
      %p70 = por %p68, %p69
      %p71 = scmp.ne.s32.totalorder %s63, %s66
      %p72 = scmp.eq.s32.totalorder %s18, 0
      %p73 = por %p71, %p72
      %p74 = scmp.ne.s32.totalorder %s63, %s66
      %p75 = scmp.eq.s32.totalorder %s23, 1
      %p76 = por %p74, %p75
      %p77 = scmp.ne.s32.totalorder %s66, %s67
      %p78 = scmp.eq.s32.totalorder %s23, 0
      %p79 = por %p77, %p78
      %p80 = scmp.ne.s32.totalorder %s66, %s67
      %p81 = scmp.eq.s32.totalorder %s24, 1
      %p82 = por %p80, %p81
      %p84 = scmp.ne.s32.totalorder %s67, %s83
      %p85 = scmp.eq.s32.totalorder %s24, 0
      %p86 = por %p84, %p85
      %s87 = ssub.s32 %s25, %s37
      %s88 = ssub.s32 %s26, %s33
      %s89 = sor.u32 %s87, %s88
      %p90 = scmp.eq.s32.totalorder %s89, 0
      %s92 = sadd.s32 %s91, 1
      %s93 = scalar_select %p90, %s91, %s92
      %p96 = pneg %p90
      %p97 = scmp.eq.s32.totalorder %s18, 1
      %p98 = por %p96, %p97
      %p99 = scmp.ne.s32.totalorder %s91, %s94
      %p100 = scmp.eq.s32.totalorder %s18, 0
      %p101 = por %p99, %p100
      %p102 = scmp.ne.s32.totalorder %s91, %s94
      %p103 = scmp.eq.s32.totalorder %s23, 1
      %p104 = por %p102, %p103
      %p105 = scmp.ne.s32.totalorder %s94, %s95
      %p106 = scmp.eq.s32.totalorder %s23, 0
      %p107 = por %p105, %p106
      %p108 = scmp.ne.s32.totalorder %s94, %s95
      %p109 = scmp.eq.s32.totalorder %s24, 1
      %p110 = por %p108, %p109
      %p112 = scmp.ne.s32.totalorder %s95, %s111
      %p113 = scmp.eq.s32.totalorder %s24, 0
      %p114 = por %p112, %p113
      %s116 = sadd.s32 %s115, 1
      %p119 = scmp.eq.s32.totalorder %s18, 1
      %p120 = scmp.ne.s32.totalorder %s115, %s117
      %p121 = scmp.eq.s32.totalorder %s18, 0
      %p122 = por %p120, %p121
      %p123 = scmp.ne.s32.totalorder %s115, %s117
      %p124 = scmp.eq.s32.totalorder %s23, 1
      %p125 = por %p123, %p124
      %p126 = scmp.ne.s32.totalorder %s117, %s118
      %p127 = scmp.eq.s32.totalorder %s23, 0
      %p128 = por %p126, %p127
      %p129 = scmp.ne.s32.totalorder %s117, %s118
      %p130 = scmp.eq.s32.totalorder %s24, 1
      %p131 = por %p129, %p130
      %p133 = scmp.ne.s32.totalorder %s118, %s132
      %p134 = scmp.eq.s32.totalorder %s24, 0
      %p135 = por %p133, %p134
      %s137 = sadd.s32 %s136, 1
      %p140 = scmp.eq.s32.totalorder %s18, 1
      %p141 = scmp.ne.s32.totalorder %s136, %s138
      %p142 = scmp.eq.s32.totalorder %s18, 0
      %p143 = por %p141, %p142
      %p144 = scmp.ne.s32.totalorder %s136, %s138
      %p145 = scmp.eq.s32.totalorder %s23, 1
      %p146 = por %p144, %p145
      %p147 = scmp.ne.s32.totalorder %s138, %s139
      %p148 = scmp.eq.s32.totalorder %s23, 0
      %p149 = por %p147, %p148
      %p150 = scmp.ne.s32.totalorder %s138, %s139
      %p151 = scmp.eq.s32.totalorder %s24, 1
      %p152 = por %p150, %p151
      %p154 = scmp.ne.s32.totalorder %s139, %s153
      %p155 = scmp.eq.s32.totalorder %s24, 0
      %p156 = por %p154, %p155
      %s157 = ssub.s32 %s25, %s37
      %s158 = ssub.s32 %s26, %s33
      %s159 = sor.u32 %s157, %s158
      %p160 = scmp.eq.s32.totalorder %s159, 0
      %s162 = sadd.s32 %s161, 1
      %s163 = scalar_select %p160, %s161, %s162
      %p166 = pneg %p160
      %p167 = scmp.eq.s32.totalorder %s18, 1
      %p168 = por %p166, %p167
      %p169 = scmp.ne.s32.totalorder %s161, %s164
      %p170 = scmp.eq.s32.totalorder %s18, 0
      %p171 = por %p169, %p170
      %p172 = scmp.ne.s32.totalorder %s161, %s164
      %p173 = scmp.eq.s32.totalorder %s23, 1
      %p174 = por %p172, %p173
      %p175 = scmp.ne.s32.totalorder %s164, %s165
      %p176 = scmp.eq.s32.totalorder %s23, 0
      %p177 = por %p175, %p176
      %p178 = scmp.ne.s32.totalorder %s164, %s165
      %p179 = scmp.eq.s32.totalorder %s24, 1
      %p180 = por %p178, %p179
      %p182 = scmp.ne.s32.totalorder %s165, %s181
      %p183 = scmp.eq.s32.totalorder %s24, 0
      %p184 = por %p182, %p183
      %p185 = scmp.le.s32.totalorder 1, %s18
      %p186 = scmp.lt.s32.totalorder %s18, 3
      %p187 = pnand %p185, %p186
      %p188 = pneg %p187
      // Predicated region
      $region9: #{tpu_custom_call.1} parent=5 // pred_check
        _
      $region10: #{tpu_custom_call.1} parent=5 // pred_check_branch
        %190 = sbr.rel (%p187) target = $region12
      $region11: #{tpu_custom_call.1} parent=5 // pred_region
        %s191 = ssub.s32 %s18, 1
        // Predicated region
        $region13: #{tpu_custom_call.1} parent=11 // pred_check
          %p192 = pneg %p51
        $region14: #{tpu_custom_call.1} parent=11 // pred_check_branch
          %194 = sbr.rel (%p192) target = $region16
        $region15: #{tpu_custom_call.1} parent=11 // pred_region
          %s196 = ssub.s32 16, 16
          %197 = vsyncadd [#allocation5], %s196
          %s199 = sshll.u32 %s0, 4
          %s200 = int_to_ptr.vmem [resolvable:$true] %s199
          %202 = dma.vmem_to_smem %s200, 16, [#allocation2], [#allocation5]
        $region16: #{tpu_custom_call.1} parent=11 // pred_fallthru
          _
        // Predicated region
        $region17: #{tpu_custom_call.1} parent=11 // pred_check
          %p203 = pneg %p128
        $region18: #{tpu_custom_call.1} parent=11 // pred_check_branch
          %205 = sbr.rel (%p203) target = $region20
        $region19: #{tpu_custom_call.1} parent=11 // pred_region
          _
        $region20: #{tpu_custom_call.1} parent=11 // pred_fallthru
          _
        // Predicated region
        $region21: #{tpu_custom_call.1} parent=11 // pred_check
          %p206 = pneg %p149
        $region22: #{tpu_custom_call.1} parent=11 // pred_check_branch
          %208 = sbr.rel (%p206) target = $region24
        $region23: #{tpu_custom_call.1} parent=11 // pred_region
          _
        $region24: #{tpu_custom_call.1} parent=11 // pred_fallthru
          _
      $region12: #{tpu_custom_call.1} parent=5 // pred_fallthru
        _
      %p209 = scmp.lt.s32.totalorder %s18, 2
      // Predicated region
      $region25: #{tpu_custom_call.1} parent=5 // pred_check
        %p210 = pneg %p209
      $region26: #{tpu_custom_call.1} parent=5 // pred_check_branch
        %212 = sbr.rel (%p210) target = $region28
      $region27: #{tpu_custom_call.1} parent=5 // pred_region
        // Predicated region
        $region29: #{tpu_custom_call.1} parent=27 // pred_check
          %p213 = pneg %p73
        $region30: #{tpu_custom_call.1} parent=27 // pred_check_branch
          %215 = sbr.rel (%p213) target = $region32
        $region31: #{tpu_custom_call.1} parent=27 // pred_region
          %s216 = smul.u32 2, %s26
          %p217 = scmp.lt.s32.totalorder %s25, 1
          %s218 = scalar_select %p217, %s25, 1
          %p219 = scmp.lt.s32.totalorder %s216, 1
          %s220 = scalar_select %p219, %s216, 1
          %s221 = smul.addr %s218, 2
          %s222 = sadd.s32 %s220, %s221
          %s223 = smul.addr %s222, 8
          %s224 = scalar_lea.vmem %s1, %s223
          %s225 = smul.u32 2, %s26
        $region32: #{tpu_custom_call.1} parent=27 // pred_fallthru
          _
        // Predicated region
        $region33: #{tpu_custom_call.1} parent=27 // pred_check
          %p226 = pneg %p101
        $region34: #{tpu_custom_call.1} parent=27 // pred_check_branch
          %228 = sbr.rel (%p226) target = $region36
        $region35: #{tpu_custom_call.1} parent=27 // pred_region
          %s229 = sand.u32 %s91, 1
          %s230 = scalar_lea.sflag [#allocation3], %s229
          %s231 = sand.u32 %s91, 1
          %s232 = smul.addr %s231, 16
          %s233 = scalar_lea.vmem [#allocation6], %s232
          %s234 = smul.u32 2, %s26
          %s236 = ssub.s32 256, 256
          %237 = vsyncadd %s230, %s236
          %s238 = smul.addr %s25, 2
          %s239 = sadd.s32 %s234, %s238
          %s240 = smul.addr %s239, 128
          %s241 = scalar_lea.hbm %s2, %s240
          %s243 = sshll.u32 %s233, 4
          %s244 = int_to_ptr.vmem [resolvable:$true] %s243
          %246 = dma.hbm_to_vmem [thread:$0]  %s241, 256, %s244, %s230
        $region36: #{tpu_custom_call.1} parent=27 // pred_fallthru
          _
      $region28: #{tpu_custom_call.1} parent=5 // pred_fallthru
        _
      %p247 = scmp.le.s32.totalorder 1, %s18
      %p248 = scmp.lt.s32.totalorder %s18, 3
      %p249 = pnand %p247, %p248
      %p250 = pneg %p249
      // Predicated region
      $region37: #{tpu_custom_call.1} parent=5 // pred_check
        _
      $region38: #{tpu_custom_call.1} parent=5 // pred_check_branch
        %252 = sbr.rel (%p249) target = $region40
      $region39: #{tpu_custom_call.1} parent=5 // pred_region
        %s253 = ssub.s32 %s18, 1
        // Predicated region
        $region41: #{tpu_custom_call.1} parent=39 // pred_check
          %p254 = pneg %p51
        $region42: #{tpu_custom_call.1} parent=39 // pred_check_branch
          %256 = sbr.rel (%p254) target = $region44
        $region43: #{tpu_custom_call.1} parent=39 // pred_region
          %257 = dma.done [#allocation5], 16
        $region44: #{tpu_custom_call.1} parent=39 // pred_fallthru
          _
        %s258 = sand.u32 %s94, 1
        %s259 = scalar_lea.sflag [#allocation3], %s258
        %s260 = sand.u32 %s94, 1
        %s261 = smul.addr %s260, 16
        %s262 = scalar_lea.vmem [#allocation6], %s261
        // Predicated region
        $region45: #{tpu_custom_call.1} parent=39 // pred_check
          %p263 = pneg %p107
        $region46: #{tpu_custom_call.1} parent=39 // pred_check_branch
          %265 = sbr.rel (%p263) target = $region48
        $region47: #{tpu_custom_call.1} parent=39 // pred_region
          %266 = dma.done %s259, 256
        $region48: #{tpu_custom_call.1} parent=39 // pred_fallthru
          _
        %267 = sfence
        %p268 = pneg %p51
        %p269 = pneg %p48
        %s270 = smul.u32 2, %s28
        %p271 = scmp.lt.s32.totalorder %s27, 1
        %s272 = scalar_select %p271, %s27, 1
        %p273 = scmp.lt.s32.totalorder %s270, 1
        %s274 = scalar_select %p273, %s270, 1
        %s275 = smul.addr %s272, 2
        %s276 = sadd.s32 %s274, %s275
        %s277 = smul.addr %s276, 8
        %s278 = scalar_lea.vmem %s1, %s277
        %p279 = pneg %p79
        %p280 = pneg %p76
        %s281 = sand.u32 %s94, 1
        %s282 = scalar_lea.sflag [#allocation3], %s281
        %s283 = sand.u32 %s94, 1
        %s284 = smul.addr %s283, 16
        %s285 = scalar_lea.vmem [#allocation6], %s284
        %p286 = pneg %p107
        %p287 = pneg %p104
        %p288 = pneg %p128
        %p289 = pneg %p125
        %p290 = pneg %p149
        %p291 = pneg %p146
        %p292 = pneg %p177
        %p293 = pneg %p174
        %s294 = sand.u32 %s164, 1
        %s295 = scalar_lea.sflag [#allocation4], %s294
        %s296 = sand.u32 %s164, 1
        %s297 = smul.addr %s296, 32
        %s298 = scalar_lea.vmem [#allocation7], %s297
        %s299 = smul.u32 2, %s28
        %p300 = scmp.lt.s32.totalorder %s27, 1
        %s301 = scalar_select %p300, %s27, 1
        %p302 = scmp.lt.s32.totalorder %s299, 1
        %s303 = scalar_select %p302, %s299, 1
        %s304 = smul.addr %s301, 2
        %s305 = sadd.s32 %s303, %s304
        %s306 = smul.addr %s305, 8
        %s307 = scalar_lea.vmem %s1, %s306
        %s308 = smul.u32 2, %s28
        %s309 = smul.u32 2, %s28
        %s310 = smul.u32 2, %s28
        %s311 = sld [smem:[#allocation2]]
        %v312 = vld [vmem:[%s307] sm:$0xff]
        %v313 = vld [vmem:[%s307 + $0x8] sm:$0xff]
        %v314 = vstv %s311
        %v315 = vmul.f32 %v314, %v312
        %v316 = vmul.f32 %v314, %v313
        %s317 = sld [smem:[#allocation2 + $0x1]]
        %v318 = vld [vmem:[%s262] sm:$0xff]
        %v319 = vld [vmem:[%s262 + $0x8] sm:$0xff]
        %v320 = vstv %s317
        %v321 = vmul.f32 %v320, %v318
        %v322 = vmul.f32 %v320, %v319
        %v323 = vadd.f32 %v315, %v321
        %v324 = vadd.f32 %v316, %v322
        %v325 = vmul.f32 %v323, 0.5
        %v326 = vmul.f32 %v324, 0.5
        %v327 = vtanh.pop %v325
        %v328 = vtanh.pop %v326
        %v329 = vadd.f32 %v327, 1.0
        %v330 = vadd.f32 %v328, 1.0
        %v331 = vmul.f32 %v325, %v329
        %v332 = vmul.f32 %v326, %v330
        %v333 = vld [vmem:[%s3] sm:$0xff]
        %v334 = vld [vmem:[%s3 + $0x8] sm:$0xff]
        %v335 = vld [vmem:[%s4] sm:$0xff]
        %v336 = vld [vmem:[%s4 + $0x8] sm:$0xff]
        %338 = vset.pattern.permute.xlu0 0
        %339 = vperm.xlu0 %338, %v335
        %v340 = vpop.permute.xlu0 %339
        %343 = vset.pattern.permute.xlu0 0
        %344 = vperm.xlu0 %343, %v336
        %v345 = vpop.permute.xlu0 %344
        %vm347 = vcmask 64512
        %v349 = vsel %vm347, %v333, 0
        %v352 = vsel %vm347, %v334, 0
        %v354 = vand.u32 %v332, 4294901760
        %355 = vmatprep.subr.mxu0 %v354
        %v356 = vand.u32 %v331, 4294901760
        %357 = vmatpush1.msra.mxu0 %v356
        %358 = vmatprep.subr.mxu0 0.0
        %359 = vmatpush1.msra.mxu0 0.0
        %360 = vmatprep.subr.mxu0 0.0
        %361 = vmatpush1.msra.mxu0 0.0
        %362 = vmatprep.subr.mxu0 0.0
        %363 = vmatpush1.msra.mxu0 0.0
        %364 = vmatprep.subr.mxu0 0.0
        %365 = vmatpush1.msra.mxu0 0.0
        %366 = vmatprep.subr.mxu0 0.0
        %367 = vmatpush1.msra.mxu0 0.0
        %368 = vmatprep.subr.mxu0 0.0
        %369 = vmatpush1.msra.mxu0 0.0
        %370 = vmatprep.subr.mxu0 0.0
        %371 = vmatpush1.msra.mxu0 0.0
        %372 = vmatprep.subr.mxu0 0.0
        %373 = vmatpush1.msra.mxu0 0.0
        %374 = vmatprep.subr.mxu0 0.0
        %375 = vmatpush1.msra.mxu0 0.0
        %376 = vmatprep.subr.mxu0 0.0
        %377 = vmatpush1.msra.mxu0 0.0
        %378 = vmatprep.subr.mxu0 0.0
        %379 = vmatpush1.msra.mxu0 0.0
        %380 = vmatprep.subr.mxu0 0.0
        %381 = vmatpush1.msra.mxu0 0.0
        %382 = vmatprep.subr.mxu0 0.0
        %383 = vmatpush1.msra.mxu0 0.0
        %384 = vmatprep.subr.mxu0 0.0
        %385 = vmatpush1.msra.mxu0 0.0
        %386 = vmatprep.subr.mxu0 0.0
        %387 = vmatpush1.msra.mxu0 0.0
        %388 = vmatprep.subr.mxu0 0.0
        %389 = vmatpush1.msra.mxu0 0.0
        %390 = vmatprep.subr.mxu0 0.0
        %391 = vmatpush1.msra.mxu0 0.0
        %392 = vmatprep.subr.mxu0 0.0
        %393 = vmatpush1.msra.mxu0 0.0
        %394 = vmatprep.subr.mxu0 0.0
        %395 = vmatpush1.msra.mxu0 0.0
        %396 = vmatprep.subr.mxu0 0.0
        %397 = vmatpush1.msra.mxu0 0.0
        %398 = vmatprep.subr.mxu0 0.0
        %399 = vmatpush1.msra.mxu0 0.0
        %400 = vmatprep.subr.mxu0 0.0
        %401 = vmatpush1.msra.mxu0 0.0
        %402 = vmatprep.subr.mxu0 0.0
        %403 = vmatpush1.msra.mxu0 0.0
        %404 = vmatprep.subr.mxu0 0.0
        %405 = vmatpush1.msra.mxu0 0.0
        %406 = vmatprep.subr.mxu0 0.0
        %407 = vmatpush1.msra.mxu0 0.0
        %408 = vmatprep.subr.mxu0 0.0
        %409 = vmatpush1.msra.mxu0 0.0
        %410 = vmatprep.subr.mxu0 0.0
        %411 = vmatpush1.msra.mxu0 0.0
        %412 = vmatprep.subr.mxu0 0.0
        %413 = vmatpush1.msra.mxu0 0.0
        %414 = vmatprep.subr.mxu0 0.0
        %415 = vmatpush1.msra.mxu0 0.0
        %416 = vmatprep.subr.mxu0 0.0
        %417 = vmatpush1.msra.mxu0 0.0
        %418 = vmatprep.subr.mxu0 0.0
        %419 = vmatpush1.msra.mxu0 0.0
        %420 = vmatprep.mubr.f32.mxu0 0.0
        %v421 = vand.u32 %v349, 4294901760
        %v422 = vsub.f32 %v349, %v421
        %v423 = vand.u32 %v422, 4294901760
        %v424 = vsub.f32 %v422, %v423
        %v425 = vand.u32 %v424, 4294901760
        %426 = vmatmul.mubr.f32.gmra.mrb[0].mxu0 %v425
        %v427 = vpop.f32.mrb[0].mxu0
        %v428 = vadd.f32 %v340, %v427
        %v429 = vpop.f32.mrb[0].mxu0
        %v430 = vadd.f32 %v340, %v429
        %431 = vmatprep.mubr.f32.mxu0 0.0
        %v432 = vand.u32 %v352, 4294901760
        %v433 = vsub.f32 %v352, %v432
        %v434 = vand.u32 %v433, 4294901760
        %v435 = vsub.f32 %v433, %v434
        %v436 = vand.u32 %v435, 4294901760
        %437 = vmatmul.mubr.f32.gmra.mrb[0].mxu0 %v436
        %v438 = vpop.f32.mrb[0].mxu0
        %v439 = vadd.f32 %v345, %v438
        %v440 = vpop.f32.mrb[0].mxu0
        %v441 = vadd.f32 %v345, %v440
        %442 = vdwg.mxu0
        %v443 = vand.u32 %v332, 4294901760
        %v444 = vsub.f32 %v332, %v443
        %v445 = vand.u32 %v444, 4294901760
        %v446 = vsub.f32 %v444, %v445
        %v447 = vand.u32 %v446, 4294901760
        %448 = vmatprep.subr.mxu0 %v447
        %v449 = vand.u32 %v331, 4294901760
        %v450 = vsub.f32 %v331, %v449
        %v451 = vand.u32 %v450, 4294901760
        %v452 = vsub.f32 %v450, %v451
        %v453 = vand.u32 %v452, 4294901760
        %454 = vmatpush1.msra.mxu0 %v453
        %455 = vmatprep.subr.mxu0 0.0
        %456 = vmatpush1.msra.mxu0 0.0
        %457 = vmatprep.subr.mxu0 0.0
        %458 = vmatpush1.msra.mxu0 0.0
        %459 = vmatprep.subr.mxu0 0.0
        %460 = vmatpush1.msra.mxu0 0.0
        %461 = vmatprep.subr.mxu0 0.0
        %462 = vmatpush1.msra.mxu0 0.0
        %463 = vmatprep.subr.mxu0 0.0
        %464 = vmatpush1.msra.mxu0 0.0
        %465 = vmatprep.subr.mxu0 0.0
        %466 = vmatpush1.msra.mxu0 0.0
        %467 = vmatprep.subr.mxu0 0.0
        %468 = vmatpush1.msra.mxu0 0.0
        %469 = vmatprep.subr.mxu0 0.0
        %470 = vmatpush1.msra.mxu0 0.0
        %471 = vmatprep.subr.mxu0 0.0
        %472 = vmatpush1.msra.mxu0 0.0
        %473 = vmatprep.subr.mxu0 0.0
        %474 = vmatpush1.msra.mxu0 0.0
        %475 = vmatprep.subr.mxu0 0.0
        %476 = vmatpush1.msra.mxu0 0.0
        %477 = vmatprep.subr.mxu0 0.0
        %478 = vmatpush1.msra.mxu0 0.0
        %479 = vmatprep.subr.mxu0 0.0
        %480 = vmatpush1.msra.mxu0 0.0
        %481 = vmatprep.subr.mxu0 0.0
        %482 = vmatpush1.msra.mxu0 0.0
        %483 = vmatprep.subr.mxu0 0.0
        %484 = vmatpush1.msra.mxu0 0.0
        %485 = vmatprep.subr.mxu0 0.0
        %486 = vmatpush1.msra.mxu0 0.0
        %487 = vmatprep.subr.mxu0 0.0
        %488 = vmatpush1.msra.mxu0 0.0
        %489 = vmatprep.subr.mxu0 0.0
        %490 = vmatpush1.msra.mxu0 0.0
        %491 = vmatprep.subr.mxu0 0.0
        %492 = vmatpush1.msra.mxu0 0.0
        %493 = vmatprep.subr.mxu0 0.0
        %494 = vmatpush1.msra.mxu0 0.0
        %495 = vmatprep.subr.mxu0 0.0
        %496 = vmatpush1.msra.mxu0 0.0
        %497 = vmatprep.subr.mxu0 0.0
        %498 = vmatpush1.msra.mxu0 0.0
        %499 = vmatprep.subr.mxu0 0.0
        %500 = vmatpush1.msra.mxu0 0.0
        %501 = vmatprep.subr.mxu0 0.0
        %502 = vmatpush1.msra.mxu0 0.0
        %503 = vmatprep.subr.mxu0 0.0
        %504 = vmatpush1.msra.mxu0 0.0
        %505 = vmatprep.subr.mxu0 0.0
        %506 = vmatpush1.msra.mxu0 0.0
        %507 = vmatprep.subr.mxu0 0.0
        %508 = vmatpush1.msra.mxu0 0.0
        %509 = vmatprep.subr.mxu0 0.0
        %510 = vmatpush1.msra.mxu0 0.0
        %511 = vmatprep.subr.mxu0 0.0
        %512 = vmatpush1.msra.mxu0 0.0
        %513 = vmatprep.subr.mxu0 0.0
        %514 = vmatpush1.msra.mxu0 0.0
        %515 = vmatprep.subr.mxu0 0.0
        %516 = vmatpush1.msra.mxu0 0.0
        %517 = vmatprep.mubr.f32.mxu0 0.0
        %v518 = vand.u32 %v349, 4294901760
        %519 = vmatmul.mubr.f32.gmra.mrb[0].mxu0 %v518
        %v520 = vpop.f32.mrb[0].mxu0
        %v521 = vadd.f32 %v428, %v520
        %v522 = vpop.f32.mrb[0].mxu0
        %v523 = vadd.f32 %v430, %v522
        %524 = vmatprep.mubr.f32.mxu0 0.0
        %v525 = vand.u32 %v352, 4294901760
        %526 = vmatmul.mubr.f32.gmra.mrb[0].mxu0 %v525
        %v527 = vpop.f32.mrb[0].mxu0
        %v528 = vadd.f32 %v439, %v527
        %v529 = vpop.f32.mrb[0].mxu0
        %v530 = vadd.f32 %v441, %v529
        %531 = vdwg.mxu0
        %v532 = vand.u32 %v332, 4294901760
        %v533 = vsub.f32 %v332, %v532
        %534 = vmatprep.subr.mxu0 %v533
        %v535 = vand.u32 %v331, 4294901760
        %v536 = vsub.f32 %v331, %v535
        %537 = vmatpush1.msra.mxu0 %v536
        %538 = vmatprep.subr.mxu0 0.0
        %539 = vmatpush1.msra.mxu0 0.0
        %540 = vmatprep.subr.mxu0 0.0
        %541 = vmatpush1.msra.mxu0 0.0
        %542 = vmatprep.subr.mxu0 0.0
        %543 = vmatpush1.msra.mxu0 0.0
        %544 = vmatprep.subr.mxu0 0.0
        %545 = vmatpush1.msra.mxu0 0.0
        %546 = vmatprep.subr.mxu0 0.0
        %547 = vmatpush1.msra.mxu0 0.0
        %548 = vmatprep.subr.mxu0 0.0
        %549 = vmatpush1.msra.mxu0 0.0
        %550 = vmatprep.subr.mxu0 0.0
        %551 = vmatpush1.msra.mxu0 0.0
        %552 = vmatprep.subr.mxu0 0.0
        %553 = vmatpush1.msra.mxu0 0.0
        %554 = vmatprep.subr.mxu0 0.0
        %555 = vmatpush1.msra.mxu0 0.0
        %556 = vmatprep.subr.mxu0 0.0
        %557 = vmatpush1.msra.mxu0 0.0
        %558 = vmatprep.subr.mxu0 0.0
        %559 = vmatpush1.msra.mxu0 0.0
        %560 = vmatprep.subr.mxu0 0.0
        %561 = vmatpush1.msra.mxu0 0.0
        %562 = vmatprep.subr.mxu0 0.0
        %563 = vmatpush1.msra.mxu0 0.0
        %564 = vmatprep.subr.mxu0 0.0
        %565 = vmatpush1.msra.mxu0 0.0
        %566 = vmatprep.subr.mxu0 0.0
        %567 = vmatpush1.msra.mxu0 0.0
        %568 = vmatprep.subr.mxu0 0.0
        %569 = vmatpush1.msra.mxu0 0.0
        %570 = vmatprep.subr.mxu0 0.0
        %571 = vmatpush1.msra.mxu0 0.0
        %572 = vmatprep.subr.mxu0 0.0
        %573 = vmatpush1.msra.mxu0 0.0
        %574 = vmatprep.subr.mxu0 0.0
        %575 = vmatpush1.msra.mxu0 0.0
        %576 = vmatprep.subr.mxu0 0.0
        %577 = vmatpush1.msra.mxu0 0.0
        %578 = vmatprep.subr.mxu0 0.0
        %579 = vmatpush1.msra.mxu0 0.0
        %580 = vmatprep.subr.mxu0 0.0
        %581 = vmatpush1.msra.mxu0 0.0
        %582 = vmatprep.subr.mxu0 0.0
        %583 = vmatpush1.msra.mxu0 0.0
        %584 = vmatprep.subr.mxu0 0.0
        %585 = vmatpush1.msra.mxu0 0.0
        %586 = vmatprep.subr.mxu0 0.0
        %587 = vmatpush1.msra.mxu0 0.0
        %588 = vmatprep.subr.mxu0 0.0
        %589 = vmatpush1.msra.mxu0 0.0
        %590 = vmatprep.subr.mxu0 0.0
        %591 = vmatpush1.msra.mxu0 0.0
        %592 = vmatprep.subr.mxu0 0.0
        %593 = vmatpush1.msra.mxu0 0.0
        %594 = vmatprep.subr.mxu0 0.0
        %595 = vmatpush1.msra.mxu0 0.0
        %596 = vmatprep.subr.mxu0 0.0
        %597 = vmatpush1.msra.mxu0 0.0
        %598 = vmatprep.subr.mxu0 0.0
        %599 = vmatpush1.msra.mxu0 0.0
        %600 = vmatprep.mubr.f32.mxu0 0.0
        %v601 = vand.u32 %v349, 4294901760
        %v602 = vsub.f32 %v349, %v601
        %603 = vmatmul.mubr.f32.gmra.mrb[0].mxu0 %v602
        %v604 = vpop.f32.mrb[0].mxu0
        %v605 = vadd.f32 %v521, %v604
        %v606 = vpop.f32.mrb[0].mxu0
        %v607 = vadd.f32 %v523, %v606
        %608 = vmatprep.mubr.f32.mxu0 0.0
        %v609 = vand.u32 %v352, 4294901760
        %v610 = vsub.f32 %v352, %v609
        %611 = vmatmul.mubr.f32.gmra.mrb[0].mxu0 %v610
        %v612 = vpop.f32.mrb[0].mxu0
        %v613 = vadd.f32 %v528, %v612
        %v614 = vpop.f32.mrb[0].mxu0
        %v615 = vadd.f32 %v530, %v614
        %616 = vdwg.mxu0
        %v617 = vand.u32 %v332, 4294901760
        %618 = vmatprep.subr.mxu0 %v617
        %v619 = vand.u32 %v331, 4294901760
        %620 = vmatpush1.msra.mxu0 %v619
        %621 = vmatprep.subr.mxu0 0.0
        %622 = vmatpush1.msra.mxu0 0.0
        %623 = vmatprep.subr.mxu0 0.0
        %624 = vmatpush1.msra.mxu0 0.0
        %625 = vmatprep.subr.mxu0 0.0
        %626 = vmatpush1.msra.mxu0 0.0
        %627 = vmatprep.subr.mxu0 0.0
        %628 = vmatpush1.msra.mxu0 0.0
        %629 = vmatprep.subr.mxu0 0.0
        %630 = vmatpush1.msra.mxu0 0.0
        %631 = vmatprep.subr.mxu0 0.0
        %632 = vmatpush1.msra.mxu0 0.0
        %633 = vmatprep.subr.mxu0 0.0
        %634 = vmatpush1.msra.mxu0 0.0
        %635 = vmatprep.subr.mxu0 0.0
        %636 = vmatpush1.msra.mxu0 0.0
        %637 = vmatprep.subr.mxu0 0.0
        %638 = vmatpush1.msra.mxu0 0.0
        %639 = vmatprep.subr.mxu0 0.0
        %640 = vmatpush1.msra.mxu0 0.0
        %641 = vmatprep.subr.mxu0 0.0
        %642 = vmatpush1.msra.mxu0 0.0
        %643 = vmatprep.subr.mxu0 0.0
        %644 = vmatpush1.msra.mxu0 0.0
        %645 = vmatprep.subr.mxu0 0.0
        %646 = vmatpush1.msra.mxu0 0.0
        %647 = vmatprep.subr.mxu0 0.0
        %648 = vmatpush1.msra.mxu0 0.0
        %649 = vmatprep.subr.mxu0 0.0
        %650 = vmatpush1.msra.mxu0 0.0
        %651 = vmatprep.subr.mxu0 0.0
        %652 = vmatpush1.msra.mxu0 0.0
        %653 = vmatprep.subr.mxu0 0.0
        %654 = vmatpush1.msra.mxu0 0.0
        %655 = vmatprep.subr.mxu0 0.0
        %656 = vmatpush1.msra.mxu0 0.0
        %657 = vmatprep.subr.mxu0 0.0
        %658 = vmatpush1.msra.mxu0 0.0
        %659 = vmatprep.subr.mxu0 0.0
        %660 = vmatpush1.msra.mxu0 0.0
        %661 = vmatprep.subr.mxu0 0.0
        %662 = vmatpush1.msra.mxu0 0.0
        %663 = vmatprep.subr.mxu0 0.0
        %664 = vmatpush1.msra.mxu0 0.0
        %665 = vmatprep.subr.mxu0 0.0
        %666 = vmatpush1.msra.mxu0 0.0
        %667 = vmatprep.subr.mxu0 0.0
        %668 = vmatpush1.msra.mxu0 0.0
        %669 = vmatprep.subr.mxu0 0.0
        %670 = vmatpush1.msra.mxu0 0.0
        %671 = vmatprep.subr.mxu0 0.0
        %672 = vmatpush1.msra.mxu0 0.0
        %673 = vmatprep.subr.mxu0 0.0
        %674 = vmatpush1.msra.mxu0 0.0
        %675 = vmatprep.subr.mxu0 0.0
        %676 = vmatpush1.msra.mxu0 0.0
        %677 = vmatprep.subr.mxu0 0.0
        %678 = vmatpush1.msra.mxu0 0.0
        %679 = vmatprep.subr.mxu0 0.0
        %680 = vmatpush1.msra.mxu0 0.0
        %681 = vmatprep.subr.mxu0 0.0
        %682 = vmatpush1.msra.mxu0 0.0
        %683 = vmatprep.mubr.f32.mxu0 0.0
        %v684 = vand.u32 %v349, 4294901760
        %v685 = vsub.f32 %v349, %v684
        %v686 = vand.u32 %v685, 4294901760
        %687 = vmatmul.mubr.f32.gmra.mrb[0].mxu0 %v686
        %v688 = vpop.f32.mrb[0].mxu0
        %v689 = vadd.f32 %v605, %v688
        %v690 = vpop.f32.mrb[0].mxu0
        %v691 = vadd.f32 %v607, %v690
        %692 = vmatprep.mubr.f32.mxu0 0.0
        %v693 = vand.u32 %v352, 4294901760
        %v694 = vsub.f32 %v352, %v693
        %v695 = vand.u32 %v694, 4294901760
        %696 = vmatmul.mubr.f32.gmra.mrb[0].mxu0 %v695
        %v697 = vpop.f32.mrb[0].mxu0
        %v698 = vadd.f32 %v613, %v697
        %v699 = vpop.f32.mrb[0].mxu0
        %v700 = vadd.f32 %v615, %v699
        %701 = vdwg.mxu0
        %v702 = vand.u32 %v332, 4294901760
        %v703 = vsub.f32 %v332, %v702
        %v704 = vand.u32 %v703, 4294901760
        %705 = vmatprep.subr.mxu0 %v704
        %v706 = vand.u32 %v331, 4294901760
        %v707 = vsub.f32 %v331, %v706
        %v708 = vand.u32 %v707, 4294901760
        %709 = vmatpush1.msra.mxu0 %v708
        %710 = vmatprep.subr.mxu0 0.0
        %711 = vmatpush1.msra.mxu0 0.0
        %712 = vmatprep.subr.mxu0 0.0
        %713 = vmatpush1.msra.mxu0 0.0
        %714 = vmatprep.subr.mxu0 0.0
        %715 = vmatpush1.msra.mxu0 0.0
        %716 = vmatprep.subr.mxu0 0.0
        %717 = vmatpush1.msra.mxu0 0.0
        %718 = vmatprep.subr.mxu0 0.0
        %719 = vmatpush1.msra.mxu0 0.0
        %720 = vmatprep.subr.mxu0 0.0
        %721 = vmatpush1.msra.mxu0 0.0
        %722 = vmatprep.subr.mxu0 0.0
        %723 = vmatpush1.msra.mxu0 0.0
        %724 = vmatprep.subr.mxu0 0.0
        %725 = vmatpush1.msra.mxu0 0.0
        %726 = vmatprep.subr.mxu0 0.0
        %727 = vmatpush1.msra.mxu0 0.0
        %728 = vmatprep.subr.mxu0 0.0
        %729 = vmatpush1.msra.mxu0 0.0
        %730 = vmatprep.subr.mxu0 0.0
        %731 = vmatpush1.msra.mxu0 0.0
        %732 = vmatprep.subr.mxu0 0.0
        %733 = vmatpush1.msra.mxu0 0.0
        %734 = vmatprep.subr.mxu0 0.0
        %735 = vmatpush1.msra.mxu0 0.0
        %736 = vmatprep.subr.mxu0 0.0
        %737 = vmatpush1.msra.mxu0 0.0
        %738 = vmatprep.subr.mxu0 0.0
        %739 = vmatpush1.msra.mxu0 0.0
        %740 = vmatprep.subr.mxu0 0.0
        %741 = vmatpush1.msra.mxu0 0.0
        %742 = vmatprep.subr.mxu0 0.0
        %743 = vmatpush1.msra.mxu0 0.0
        %744 = vmatprep.subr.mxu0 0.0
        %745 = vmatpush1.msra.mxu0 0.0
        %746 = vmatprep.subr.mxu0 0.0
        %747 = vmatpush1.msra.mxu0 0.0
        %748 = vmatprep.subr.mxu0 0.0
        %749 = vmatpush1.msra.mxu0 0.0
        %750 = vmatprep.subr.mxu0 0.0
        %751 = vmatpush1.msra.mxu0 0.0
        %752 = vmatprep.subr.mxu0 0.0
        %753 = vmatpush1.msra.mxu0 0.0
        %754 = vmatprep.subr.mxu0 0.0
        %755 = vmatpush1.msra.mxu0 0.0
        %756 = vmatprep.subr.mxu0 0.0
        %757 = vmatpush1.msra.mxu0 0.0
        %758 = vmatprep.subr.mxu0 0.0
        %759 = vmatpush1.msra.mxu0 0.0
        %760 = vmatprep.subr.mxu0 0.0
        %761 = vmatpush1.msra.mxu0 0.0
        %762 = vmatprep.subr.mxu0 0.0
        %763 = vmatpush1.msra.mxu0 0.0
        %764 = vmatprep.subr.mxu0 0.0
        %765 = vmatpush1.msra.mxu0 0.0
        %766 = vmatprep.subr.mxu0 0.0
        %767 = vmatpush1.msra.mxu0 0.0
        %768 = vmatprep.subr.mxu0 0.0
        %769 = vmatpush1.msra.mxu0 0.0
        %770 = vmatprep.subr.mxu0 0.0
        %771 = vmatpush1.msra.mxu0 0.0
        %772 = vmatprep.mubr.f32.mxu0 0.0
        %v773 = vand.u32 %v349, 4294901760
        %774 = vmatmul.mubr.f32.gmra.mrb[0].mxu0 %v773
        %v775 = vpop.f32.mrb[0].mxu0
        %v776 = vadd.f32 %v689, %v775
        %v777 = vpop.f32.mrb[0].mxu0
        %v778 = vadd.f32 %v691, %v777
        %779 = vmatprep.mubr.f32.mxu0 0.0
        %v780 = vand.u32 %v352, 4294901760
        %781 = vmatmul.mubr.f32.gmra.mrb[0].mxu0 %v780
        %v782 = vpop.f32.mrb[0].mxu0
        %v783 = vadd.f32 %v698, %v782
        %v784 = vpop.f32.mrb[0].mxu0
        %v785 = vadd.f32 %v700, %v784
        %786 = vdwg.mxu0
        %v787 = vand.u32 %v332, 4294901760
        %788 = vmatprep.subr.mxu0 %v787
        %v789 = vand.u32 %v331, 4294901760
        %790 = vmatpush1.msra.mxu0 %v789
        %791 = vmatprep.subr.mxu0 0.0
        %792 = vmatpush1.msra.mxu0 0.0
        %793 = vmatprep.subr.mxu0 0.0
        %794 = vmatpush1.msra.mxu0 0.0
        %795 = vmatprep.subr.mxu0 0.0
        %796 = vmatpush1.msra.mxu0 0.0
        %797 = vmatprep.subr.mxu0 0.0
        %798 = vmatpush1.msra.mxu0 0.0
        %799 = vmatprep.subr.mxu0 0.0
        %800 = vmatpush1.msra.mxu0 0.0
        %801 = vmatprep.subr.mxu0 0.0
        %802 = vmatpush1.msra.mxu0 0.0
        %803 = vmatprep.subr.mxu0 0.0
        %804 = vmatpush1.msra.mxu0 0.0
        %805 = vmatprep.subr.mxu0 0.0
        %806 = vmatpush1.msra.mxu0 0.0
        %807 = vmatprep.subr.mxu0 0.0
        %808 = vmatpush1.msra.mxu0 0.0
        %809 = vmatprep.subr.mxu0 0.0
        %810 = vmatpush1.msra.mxu0 0.0
        %811 = vmatprep.subr.mxu0 0.0
        %812 = vmatpush1.msra.mxu0 0.0
        %813 = vmatprep.subr.mxu0 0.0
        %814 = vmatpush1.msra.mxu0 0.0
        %815 = vmatprep.subr.mxu0 0.0
        %816 = vmatpush1.msra.mxu0 0.0
        %817 = vmatprep.subr.mxu0 0.0
        %818 = vmatpush1.msra.mxu0 0.0
        %819 = vmatprep.subr.mxu0 0.0
        %820 = vmatpush1.msra.mxu0 0.0
        %821 = vmatprep.subr.mxu0 0.0
        %822 = vmatpush1.msra.mxu0 0.0
        %823 = vmatprep.subr.mxu0 0.0
        %824 = vmatpush1.msra.mxu0 0.0
        %825 = vmatprep.subr.mxu0 0.0
        %826 = vmatpush1.msra.mxu0 0.0
        %827 = vmatprep.subr.mxu0 0.0
        %828 = vmatpush1.msra.mxu0 0.0
        %829 = vmatprep.subr.mxu0 0.0
        %830 = vmatpush1.msra.mxu0 0.0
        %831 = vmatprep.subr.mxu0 0.0
        %832 = vmatpush1.msra.mxu0 0.0
        %833 = vmatprep.subr.mxu0 0.0
        %834 = vmatpush1.msra.mxu0 0.0
        %835 = vmatprep.subr.mxu0 0.0
        %836 = vmatpush1.msra.mxu0 0.0
        %837 = vmatprep.subr.mxu0 0.0
        %838 = vmatpush1.msra.mxu0 0.0
        %839 = vmatprep.subr.mxu0 0.0
        %840 = vmatpush1.msra.mxu0 0.0
        %841 = vmatprep.subr.mxu0 0.0
        %842 = vmatpush1.msra.mxu0 0.0
        %843 = vmatprep.subr.mxu0 0.0
        %844 = vmatpush1.msra.mxu0 0.0
        %845 = vmatprep.subr.mxu0 0.0
        %846 = vmatpush1.msra.mxu0 0.0
        %847 = vmatprep.subr.mxu0 0.0
        %848 = vmatpush1.msra.mxu0 0.0
        %849 = vmatprep.subr.mxu0 0.0
        %850 = vmatpush1.msra.mxu0 0.0
        %851 = vmatprep.subr.mxu0 0.0
        %852 = vmatpush1.msra.mxu0 0.0
        %853 = vmatprep.mubr.f32.mxu0 0.0
        %v854 = vand.u32 %v349, 4294901760
        %855 = vmatmul.mubr.f32.gmra.mrb[0].mxu0 %v854
        %v856 = vpop.f32.mrb[0].mxu0
        %v857 = vadd.f32 %v776, %v856
        %v858 = vpop.f32.mrb[0].mxu0
        %v859 = vadd.f32 %v778, %v858
        %860 = vmatprep.mubr.f32.mxu0 0.0
        %v861 = vand.u32 %v352, 4294901760
        %862 = vmatmul.mubr.f32.gmra.mrb[0].mxu0 %v861
        %v863 = vpop.f32.mrb[0].mxu0
        %v864 = vadd.f32 %v783, %v863
        %v865 = vpop.f32.mrb[0].mxu0
        %v866 = vadd.f32 %v785, %v865
        %867 = vdwg.mxu0
        %868 = vst [vmem:[%s298] sm:$0xff] %v857
        %869 = vst [vmem:[%s298 + $0x8] sm:$0xff] %v859
        %870 = vst [vmem:[%s298 + $0x10] sm:$0xff] %v864
        %871 = vst [vmem:[%s298 + $0x18] sm:$0xff] %v866
        %s872 = sand.u32 %s164, 1
        %s873 = scalar_lea.sflag [#allocation4], %s872
        %s874 = sand.u32 %s164, 1
        %s875 = smul.addr %s874, 32
        %s876 = scalar_lea.vmem [#allocation7], %s875
        // Predicated region
        $region49: #{tpu_custom_call.1} parent=39 // pred_check
          %p877 = pneg %p174
        $region50: #{tpu_custom_call.1} parent=39 // pred_check_branch
          %879 = sbr.rel (%p877) target = $region52
        $region51: #{tpu_custom_call.1} parent=39 // pred_region
          %s880 = smul.u32 2, %s28
          %s882 = ssub.s32 512, 512
          %883 = vsyncadd %s873, %s882
          %s884 = smul.addr %s27, 4
          %s885 = sadd.s32 %s880, %s884
          %s886 = smul.addr %s885, 128
          %s887 = scalar_lea.hbm %s5, %s886
          %s888 = sshll.u32 %s876, 4
          %s889 = int_to_ptr.vmem [resolvable:$true] %s888
          %894 = dma.vmem_to_hbm [thread:$0]  %s889, 512, %s887, %s873, 256, 256, 16
        $region52: #{tpu_custom_call.1} parent=39 // pred_fallthru
          _
      $region40: #{tpu_custom_call.1} parent=5 // pred_fallthru
        _
      %p895 = scmp.le.s32.totalorder 2, %s18
      // Predicated region
      $region53: #{tpu_custom_call.1} parent=5 // pred_check
        %p896 = pneg %p895
      $region54: #{tpu_custom_call.1} parent=5 // pred_check_branch
        %898 = sbr.rel (%p896) target = $region56
      $region55: #{tpu_custom_call.1} parent=5 // pred_region
        %s899 = ssub.s32 %s18, 2
        // Predicated region
        $region57: #{tpu_custom_call.1} parent=55 // pred_check
          %p900 = pneg %p180
        $region58: #{tpu_custom_call.1} parent=55 // pred_check_branch
          %902 = sbr.rel (%p900) target = $region60
        $region59: #{tpu_custom_call.1} parent=55 // pred_region
          %s903 = sand.u32 %s165, 1
          %s904 = scalar_lea.sflag [#allocation4], %s903
          %s905 = sand.u32 %s165, 1
          %s906 = smul.addr %s905, 32
          %s907 = scalar_lea.vmem [#allocation7], %s906
          %908 = dma.done %s904, 512
        $region60: #{tpu_custom_call.1} parent=55 // pred_fallthru
          _
      $region56: #{tpu_custom_call.1} parent=5 // pred_fallthru
        _
    $region6: #{tpu_custom_call.1} parent=1 // loop_footer
      %s22 = sadd.s32 1, %s18
    $region7: #{tpu_custom_call.1} parent=1 // loop_footer_branch
      %17 = sbr.rel target = $region3
    $region8: #{tpu_custom_call.1} parent=1 // loop_exit
      _
    %909 = vsyncpa [#allocation3], 1
    %s910 = scalar_lea.sflag [#allocation3], 1
    %911 = vsyncpa %s910, 1
    %912 = vsyncpa [#allocation4], 1
    %s913 = scalar_lea.sflag [#allocation4], 1
    %914 = vsyncpa %s913, 1
    %915 = vsyncpa [#allocation5], 1
    %s916 = scalar_lea.sflag [#allocation5], 1
    %917 = vsyncpa %s916, 1

</llo_original>
